<compile_context>
chip_gen: v6e
topology: v6e:2x2x1
jax: 0.10.0
libtpu: 0.0.40
codegen_flags: <defaults>
</compile_context>

<pallas_src>
import functools

import jax
import jax.numpy as jnp
import numpy as np
from jax import lax
from jax.experimental import pallas as pl
from jax.experimental.pallas import tpu as pltpu


def _pick_t_tile(T):
    """Largest lane-aligned T tile (multiple of 128, <= 512) dividing T; else full T."""
    for cand in (512, 384, 256, 128):
        if T % cand == 0:
            return cand
    return T


def _inter_cue_kernel(x_ref, ic_ref, w_ref, b_ref, o_ref, *, K, pad):
    """Fused Conv1d(k=K, pad) -> channel concat -> ReLU for one (batch, T-tile) step.

    Native NCT layout (channels on sublanes, time on lanes):
      x_ref  : (C_in, T + 2*pad)   bf16 zero-padded time row, resident across t steps
      ic_ref : (C_half, T_TILE)    bf16 intra-cue tile
      w_ref  : (K, C_half, C_in)   bf16 conv weight, tap-major
      b_ref  : (C_half, 1)         f32 bias
      o_ref  : (C_out, T_TILE)     output tile, C_out = 2*C_half
    """
    C_half = w_ref.shape[1]
    T_TILE = o_ref.shape[-1]
    win = T_TILE + 2 * pad

    if x_ref.shape[-1] == win:
        # Single T tile (small T): fully static window.
        xs = x_ref[...]
    else:
        # Tiled T: window with a 2*pad halo; tile starts are T_TILE-aligned
        # (multiple of 128 in production) so the load stays lane-friendly.
        start = pl.multiple_of(pl.program_id(1) * T_TILE, T_TILE)
        xs = x_ref[:, pl.ds(start, win)]

    # K-tap accumulation: conv = sum_k W_k @ x_pad[:, k : k+T_TILE].
    # Avoids the K-times im2col temp entirely; each tap is one MXU matmul with
    # f32 accumulation (results summed in f32 on the VPU).
    conv = jnp.dot(w_ref[0], xs[:, 0:T_TILE], preferred_element_type=jnp.float32)
    for k in range(1, K):
        conv = conv + jnp.dot(w_ref[k], xs[:, k:k + T_TILE],
                              preferred_element_type=jnp.float32)
    conv = conv + b_ref[...]          # bias + ReLU kept in f32 (v5e VPU has no bf16)

    # Write the two channel halves straight into the output (sublane-range stores);
    # no concat shuffle, no (C_out, T) temp, intra_cue never touches the matmul path.
    o_ref[:C_half, :] = jnp.maximum(conv, 0.0).astype(o_ref.dtype)
    o_ref[C_half:, :] = jnp.maximum(ic_ref[...].astype(jnp.float32), 0.0).astype(o_ref.dtype)


def inter_cue_path_forward(x_nct, intra_cue_nct, w, b, *, padding=2,
                           compute_dtype=jnp.bfloat16, out_dtype=jnp.float32):
    """Matches Inter_Cue_path.forward.

    x_nct         : (N, C_in, T)        PyTorch NCT layout
    intra_cue_nct : (N, C_half, T)      C_half = out_channel // 2
    w             : (C_half, C_in, K)   torch Conv1d weight layout
    b             : (C_half,)
    returns       : (N, 2*C_half, T)
    """
    N, C_in, T = x_nct.shape
    C_half, _, K = w.shape
    assert intra_cue_nct.shape == (N, C_half, T)
    C_out = 2 * C_half

    T_TILE = _pick_t_tile(T)
    num_t = T // T_TILE
    T_full = T + 2 * padding

    # Native NCT layout: no transposes.  Zero-pad T once in the wrapper (fuses with the
    # bf16 cast) so every tile's 2*pad halo read is in bounds.  In production the
    # upstream layer should already emit bf16, making the cast free.
    x_p = jnp.pad(x_nct.astype(compute_dtype), ((0, 0), (0, 0), (padding, padding)))
    ic = intra_cue_nct.astype(compute_dtype)
    w_t = jnp.transpose(w, (2, 0, 1)).astype(compute_dtype)   # (K, C_half, C_in)
    b2 = b.reshape(C_half, 1).astype(jnp.float32)

    kernel = functools.partial(_inter_cue_kernel, K=K, pad=padding)

    itm = jnp.dtype(compute_dtype).itemsize
    otm = jnp.dtype(out_dtype).itemsize
    flops = 2 * N * T * (K * C_in) * C_half + 2 * N * T * C_out
    bytes_accessed = ((x_p.size + ic.size + w_t.size) * itm + b2.size * 4
                      + N * C_out * T * otm)

    # Per-step VMEM budget: double-buffered x row / ic tile / out tile + weights + temps.
    vmem_est = (2 * C_in * T_full * itm + 2 * C_half * T_TILE * itm
                + 2 * C_out * T_TILE * otm + K * C_half * C_in * itm
                + C_half * 4 + 2 * C_half * T_TILE * 4 + (1 << 20))
    vmem_limit = int(min(48 << 20, max(16 << 20, 4 * vmem_est)))   # v7x-safe headroom

    out = pl.pallas_call(
        kernel,
        out_shape=jax.ShapeDtypeStruct((N, C_out, T), out_dtype),
        grid_spec=pltpu.PrefetchScalarGridSpec(
            num_scalar_prefetch=0,
            grid=(N, num_t),
            in_specs=[
                # x: full padded time row per batch element; same block index across the
                # t axis -> stays resident in VMEM, DMA'd once per n.
                pl.BlockSpec((pl.Squeezed(), C_in, T_full), lambda n, t: (n, 0, 0)),
                pl.BlockSpec((pl.Squeezed(), C_half, T_TILE), lambda n, t: (n, 0, t)),
                pl.BlockSpec((K, C_half, C_in), lambda n, t: (0, 0, 0)),
                pl.BlockSpec((C_half, 1), lambda n, t: (0, 0)),
            ],
            out_specs=pl.BlockSpec((pl.Squeezed(), C_out, T_TILE), lambda n, t: (n, 0, t)),
        ),
        compiler_params=pltpu.CompilerParams(
            dimension_semantics=("parallel", "parallel"),
            vmem_limit_bytes=vmem_limit),
        cost_estimate=pl.CostEstimate(
            flops=flops, transcendentals=0, bytes_accessed=int(bytes_accessed)),
    )(x_p, ic, w_t, b2)
    return out
    # TODO(synk): emit bf16 output (out_dtype=jnp.bfloat16) when downstream tolerates it,
    # and keep C_in / C_half multiples of 8 at production widths for fully aligned MXU feeds.


# ---- pure-JAX reference (correctness check only) ----
def _ref_forward(x, intra_cue, w, b, padding=2):
    conv = lax.conv_general_dilated(
        x, w, window_strides=(1,), padding=[(padding, padding)],
        dimension_numbers=("NCH", "OIH", "NCH"),
    ) + b[None, :, None]
    return jnp.maximum(jnp.concatenate([conv, intra_cue], axis=1), 0.0)


if __name__ == "__main__":
    key = jax.random.PRNGKey(0)

    # Small shapes consistent with the module: (N, in_channel, T) + (N, out_channel/2, T).
    N, T = 2, 16
    in_channel, out_channel = 4, 16
    c_half = out_channel // 2
    K, padding = 5, 2

    k_w, k_b, k_x, k_ic = jax.random.split(key, 4)
    bound = 1.0 / np.sqrt(in_channel * K)
    w = jax.random.uniform(k_w, (c_half, in_channel, K), jnp.float32, -bound, bound)
    b = jax.random.uniform(k_b, (c_half,), jnp.float32, -bound, bound)
    x = jax.random.normal(k_x, (N, in_channel, T), jnp.float32)
    intra_cue = jax.random.normal(k_ic, (N, c_half, T), jnp.float32)

    out = inter_cue_path_forward(x, intra_cue, w, b, padding=padding)
    out = jax.block_until_ready(out)

    ref = _ref_forward(x, intra_cue, w, b, padding=padding)
    assert out.shape == (N, out_channel, T)
    # bf16 MXU inputs (f32 accumulation / bias / ReLU) -> loosened tolerance vs f32 ref.
    assert np.allclose(np.asarray(out), np.asarray(ref), atol=5e-2, rtol=5e-2)

    print("KERNEL_OK")
</pallas_src>

<mosaic_0001>
module attributes {stable_mosaic.version = 11 : i64} {
  func.func @_inter_cue_kernel(%arg0: i32, %arg1: i32, %arg2: memref<1x4x20xbf16, #tpu.memory_space<vmem>>, %arg3: memref<1x8x16xbf16, #tpu.memory_space<vmem>>, %arg4: memref<5x8x4xbf16, #tpu.memory_space<vmem>>, %arg5: memref<8x1xf32, #tpu.memory_space<vmem>>, %arg6: memref<1x16x16xf32, #tpu.memory_space<vmem>>) attributes {dimension_semantics = [#tpu.dimension_semantics<parallel>, #tpu.dimension_semantics<parallel>], iteration_bounds = array<i64: 2, 1>, scalar_prefetch = 0 : i64, scratch_operands = 0 : i64, tpu.core_type = #tpu.core_type<tc>, window_params = [{transform_indices = @transform_0, window_bounds = array<i64: 1, 4, 20>}, {transform_indices = @transform_1, window_bounds = array<i64: 1, 8, 16>}, {pipeline_mode = #tpu.pipeline_mode<synchronous>, transform_indices = @transform_2, window_bounds = array<i64: 5, 8, 4>}, {pipeline_mode = #tpu.pipeline_mode<synchronous>, transform_indices = @transform_3, window_bounds = array<i64: 8, 1>}, {transform_indices = @transform_4, window_bounds = array<i64: 1, 16, 16>}]} {
    %c0 = arith.constant 0 : index
    %c0_0 = arith.constant 0 : index
    %c0_1 = arith.constant 0 : index
    %0 = vector.load %arg2[%c0, %c0_0, %c0_1] : memref<1x4x20xbf16, #tpu.memory_space<vmem>>, vector<1x4x20xbf16>
    %1 = vector.shape_cast %0 : vector<1x4x20xbf16> to vector<4x20xbf16>
    %c0_2 = arith.constant 0 : index
    %c0_3 = arith.constant 0 : index
    %c0_4 = arith.constant 0 : index
    %2 = vector.load %arg4[%c0_2, %c0_3, %c0_4] : memref<5x8x4xbf16, #tpu.memory_space<vmem>>, vector<1x8x4xbf16>
    %3 = vector.shape_cast %2 : vector<1x8x4xbf16> to vector<8x4xbf16>
    %4 = vector.extract_strided_slice %1 {offsets = [0, 0], sizes = [4, 16], strides = [1, 1]} : vector<4x20xbf16> to vector<4x16xbf16>
    %cst = arith.constant dense<0.000000e+00> : vector<8x16xf32>
    %5 = tpu.matmul %3, %4, %cst {dimension_numbers = #tpu.dot_dimension_numbers<[1], [0], [0], [1], [0, 0, 1, 1], [], []>} : vector<8x4xbf16>, vector<4x16xbf16>, vector<8x16xf32> -> vector<8x16xf32>
    %c1 = arith.constant 1 : index
    %c0_5 = arith.constant 0 : index
    %c0_6 = arith.constant 0 : index
    %6 = vector.load %arg4[%c1, %c0_5, %c0_6] : memref<5x8x4xbf16, #tpu.memory_space<vmem>>, vector<1x8x4xbf16>
    %7 = vector.shape_cast %6 : vector<1x8x4xbf16> to vector<8x4xbf16>
    %8 = vector.extract_strided_slice %1 {offsets = [0, 1], sizes = [4, 16], strides = [1, 1]} : vector<4x20xbf16> to vector<4x16xbf16>
    %cst_7 = arith.constant dense<0.000000e+00> : vector<8x16xf32>
    %9 = tpu.matmul %7, %8, %cst_7 {dimension_numbers = #tpu.dot_dimension_numbers<[1], [0], [0], [1], [0, 0, 1, 1], [], []>} : vector<8x4xbf16>, vector<4x16xbf16>, vector<8x16xf32> -> vector<8x16xf32>
    %10 = arith.addf %5, %9 : vector<8x16xf32>
    %c2 = arith.constant 2 : index
    %c0_8 = arith.constant 0 : index
    %c0_9 = arith.constant 0 : index
    %11 = vector.load %arg4[%c2, %c0_8, %c0_9] : memref<5x8x4xbf16, #tpu.memory_space<vmem>>, vector<1x8x4xbf16>
    %12 = vector.shape_cast %11 : vector<1x8x4xbf16> to vector<8x4xbf16>
    %13 = vector.extract_strided_slice %1 {offsets = [0, 2], sizes = [4, 16], strides = [1, 1]} : vector<4x20xbf16> to vector<4x16xbf16>
    %cst_10 = arith.constant dense<0.000000e+00> : vector<8x16xf32>
    %14 = tpu.matmul %12, %13, %cst_10 {dimension_numbers = #tpu.dot_dimension_numbers<[1], [0], [0], [1], [0, 0, 1, 1], [], []>} : vector<8x4xbf16>, vector<4x16xbf16>, vector<8x16xf32> -> vector<8x16xf32>
    %15 = arith.addf %10, %14 : vector<8x16xf32>
    %c3 = arith.constant 3 : index
    %c0_11 = arith.constant 0 : index
    %c0_12 = arith.constant 0 : index
    %16 = vector.load %arg4[%c3, %c0_11, %c0_12] : memref<5x8x4xbf16, #tpu.memory_space<vmem>>, vector<1x8x4xbf16>
    %17 = vector.shape_cast %16 : vector<1x8x4xbf16> to vector<8x4xbf16>
    %18 = vector.extract_strided_slice %1 {offsets = [0, 3], sizes = [4, 16], strides = [1, 1]} : vector<4x20xbf16> to vector<4x16xbf16>
    %cst_13 = arith.constant dense<0.000000e+00> : vector<8x16xf32>
    %19 = tpu.matmul %17, %18, %cst_13 {dimension_numbers = #tpu.dot_dimension_numbers<[1], [0], [0], [1], [0, 0, 1, 1], [], []>} : vector<8x4xbf16>, vector<4x16xbf16>, vector<8x16xf32> -> vector<8x16xf32>
    %20 = arith.addf %15, %19 : vector<8x16xf32>
    %c4 = arith.constant 4 : index
    %c0_14 = arith.constant 0 : index
    %c0_15 = arith.constant 0 : index
    %21 = vector.load %arg4[%c4, %c0_14, %c0_15] : memref<5x8x4xbf16, #tpu.memory_space<vmem>>, vector<1x8x4xbf16>
    %22 = vector.shape_cast %21 : vector<1x8x4xbf16> to vector<8x4xbf16>
    %23 = vector.extract_strided_slice %1 {offsets = [0, 4], sizes = [4, 16], strides = [1, 1]} : vector<4x20xbf16> to vector<4x16xbf16>
    %cst_16 = arith.constant dense<0.000000e+00> : vector<8x16xf32>
    %24 = tpu.matmul %22, %23, %cst_16 {dimension_numbers = #tpu.dot_dimension_numbers<[1], [0], [0], [1], [0, 0, 1, 1], [], []>} : vector<8x4xbf16>, vector<4x16xbf16>, vector<8x16xf32> -> vector<8x16xf32>
    %25 = arith.addf %20, %24 : vector<8x16xf32>
    %c0_17 = arith.constant 0 : index
    %c0_18 = arith.constant 0 : index
    %26 = vector.load %arg5[%c0_17, %c0_18] : memref<8x1xf32, #tpu.memory_space<vmem>>, vector<8x1xf32>
    %27 = vector.broadcast %26 : vector<8x1xf32> to vector<8x16xf32>
    %28 = arith.addf %25, %27 : vector<8x16xf32>
    %cst_19 = arith.constant 0.000000e+00 : f32
    %29 = vector.broadcast %cst_19 : f32 to vector<8x16xf32>
    %30 = arith.maximumf %28, %29 : vector<8x16xf32>
    %c0_20 = arith.constant 0 : index
    %c0_21 = arith.constant 0 : index
    %c0_22 = arith.constant 0 : index
    %31 = vector.load %arg6[%c0_20, %c0_21, %c0_22] : memref<1x16x16xf32, #tpu.memory_space<vmem>>, vector<1x8x16xf32>
    %32 = vector.shape_cast %31 : vector<1x8x16xf32> to vector<8x16xf32>
    %33 = vector.shape_cast %30 : vector<8x16xf32> to vector<1x8x16xf32>
    tpu.vector_store %arg6[%c0_20, %c0_21, %c0_22], %33 {strides = array<i32>} : memref<1x16x16xf32, #tpu.memory_space<vmem>>, vector<1x8x16xf32>,
    %c0_23 = arith.constant 0 : index
    %c0_24 = arith.constant 0 : index
    %c0_25 = arith.constant 0 : index
    %34 = vector.load %arg3[%c0_23, %c0_24, %c0_25] : memref<1x8x16xbf16, #tpu.memory_space<vmem>>, vector<1x8x16xbf16>
    %35 = vector.shape_cast %34 : vector<1x8x16xbf16> to vector<8x16xbf16>
    %36 = arith.extf %35 : vector<8x16xbf16> to vector<8x16xf32>
    %cst_26 = arith.constant 0.000000e+00 : f32
    %37 = vector.broadcast %cst_26 : f32 to vector<8x16xf32>
    %38 = arith.maximumf %36, %37 : vector<8x16xf32>
    %c0_27 = arith.constant 0 : index
    %c8 = arith.constant 8 : index
    %c0_28 = arith.constant 0 : index
    %39 = vector.load %arg6[%c0_27, %c8, %c0_28] : memref<1x16x16xf32, #tpu.memory_space<vmem>>, vector<1x8x16xf32>
    %40 = vector.shape_cast %39 : vector<1x8x16xf32> to vector<8x16xf32>
    %41 = vector.shape_cast %38 : vector<8x16xf32> to vector<1x8x16xf32>
    tpu.vector_store %arg6[%c0_27, %c8, %c0_28], %41 {strides = array<i32>} : memref<1x16x16xf32, #tpu.memory_space<vmem>>, vector<1x8x16xf32>,
    return
  }
  func.func @transform_0(%arg0: i32, %arg1: i32) -> (i32, i32, i32) {
    %c0_i32 = arith.constant 0 : i32
    %c0_i32_0 = arith.constant 0 : i32
    %c0_i32_1 = arith.constant 0 : i32
    return %arg0, %c0_i32, %c0_i32_0 : i32, i32, i32
  }
  func.func @transform_1(%arg0: i32, %arg1: i32) -> (i32, i32, i32) {
    %c0_i32 = arith.constant 0 : i32
    %c0_i32_0 = arith.constant 0 : i32
    return %arg0, %c0_i32, %arg1 : i32, i32, i32
  }
  func.func @transform_2(%arg0: i32, %arg1: i32) -> (i32, i32, i32) {
    %c0_i32 = arith.constant 0 : i32
    %c0_i32_0 = arith.constant 0 : i32
    %c0_i32_1 = arith.constant 0 : i32
    %c0_i32_2 = arith.constant 0 : i32
    return %c0_i32, %c0_i32_0, %c0_i32_1 : i32, i32, i32
  }
  func.func @transform_3(%arg0: i32, %arg1: i32) -> (i32, i32) {
    %c0_i32 = arith.constant 0 : i32
    %c0_i32_0 = arith.constant 0 : i32
    %c0_i32_1 = arith.constant 0 : i32
    return %c0_i32, %c0_i32_0 : i32, i32
  }
  func.func @transform_4(%arg0: i32, %arg1: i32) -> (i32, i32, i32) {
    %c0_i32 = arith.constant 0 : i32
    %c0_i32_0 = arith.constant 0 : i32
    return %arg0, %c0_i32, %arg1 : i32, i32, i32
  }
}

</mosaic_0001>

<llo_original>
// kernel: tpu_custom_call.1
$region0: #{tpu_custom_call.1}
  #allocation0 [shape = 'u32[]', space=smem, size = 0x4, offset = 0x4, fixed_abs, tag = 'smem constant byte address 0x4 - core index']
  #allocation1 [shape = 'u32[144,128]{1,0:T(1,128)}', space=vmem, size = 0x12000, scoped, tag = 'internal scratch']
  %s0 = inlined_call_operand.vmem [shape: bf16[2,4,20], index: 0, kind: input, shape index: {}]
  %s1 = inlined_call_operand.vmem [shape: bf16[2,8,16], index: 1, kind: input, shape index: {}]
  %s2 = inlined_call_operand.vmem [shape: bf16[5,8,4], index: 2, kind: input, shape index: {}]
  %s3 = inlined_call_operand.vmem [shape: f32[8,1], index: 3, kind: input, shape index: {}]
  %s4 = inlined_call_operand.hbm [shape: f32[2,16,16], index: 4, kind: output, shape index: {}]
  %s5 = sld [smem:[#allocation0]]
  $region49: #{tpu_custom_call.1} parent=0
    _
  %s7 = ssub.s32 1, %s5
  %s8 = scalar_select 0, %s7, %s5
  $region1: #{tpu_custom_call.1} parent=0
    #allocation2 [shape = 'u8[16384]{0}', space=vmem, size = 0x4000, scoped, tag = 'output window, operand 0']
    #allocation3 [shape = 's32[2]{0}', space=sflag, size = 0x8, scoped, tag = 'scoped memory for tpu_custom_call.1']
    %9 = vsyncpa [#allocation3], 0
    %s10 = scalar_lea.sflag [#allocation3], 1
    %11 = vsyncpa %s10, 0
    loop: start=0, step=1, limit=4
    $region2: #{tpu_custom_call.1} parent=1 // loop_pre_header
      _
    $region3: #{tpu_custom_call.1} parent=1 // loop_header
      %s13 = sphi 0, %s17
      %p14 = scmp.ge.s32.totalorder %s13, 4
      %s20 = sphi 0, %s32
      %s21 = sphi 0, %s28
      %s22 = sphi 0, %s20
      %s23 = sphi 0, %s21
      %s24 = sphi 0, %s22
      %s25 = sphi 0, %s23
      %s35 = sphi 0, %s37
      %s38 = sphi 0, %s35
      %s39 = sphi 0, %s38
      %s55 = sphi 0, %s39
      %s63 = sphi 0, %s65
      %s66 = sphi 0, %s63
      %s67 = sphi 0, %s66
      %s83 = sphi 0, %s67
      %s87 = sphi 0, %s87
      %s89 = sphi 0, %s87
      %s90 = sphi 0, %s89
      %s104 = sphi 0, %s90
      %s108 = sphi 0, %s108
      %s110 = sphi 0, %s108
      %s111 = sphi 0, %s110
      %s125 = sphi 0, %s111
      %s133 = sphi 0, %s135
      %s136 = sphi 0, %s133
      %s137 = sphi 0, %s136
      %s153 = sphi 0, %s137
    $region4: #{tpu_custom_call.1} parent=1 // loop_header_branch
      %16 = sbr.rel (%p14) target = $region8
    $region5: #{tpu_custom_call.1} parent=1 // loop_body
      %s18 = ssub.s32 %s13, 1
      %s19 = ssub.s32 %s13, 2
      %s26 = sadd.s32 1, %s21
      %p27 = scmp.ge.s32.totalorder %s26, 1
      %s28 = scalar_select %p27, 0, %s26
      %s29 = sadd.s32 1, %s20
      %s30 = scalar_select %p27, %s29, %s20
      %p31 = scmp.ge.s32.totalorder %s30, 2
      %s32 = scalar_select %p31, 0, %s30
      %s33 = ssub.s32 %s20, %s32
      %p34 = scmp.eq.s32.totalorder %s33, 0
      %s36 = sadd.s32 %s35, 1
      %s37 = scalar_select %p34, %s35, %s36
      %p40 = pneg %p34
      %p41 = scmp.eq.s32.totalorder %s13, 1
      %p42 = por %p40, %p41
      %p43 = scmp.ne.s32.totalorder %s35, %s38
      %p44 = scmp.eq.s32.totalorder %s13, 0
      %p45 = por %p43, %p44
      %p46 = scmp.ne.s32.totalorder %s35, %s38
      %p47 = scmp.eq.s32.totalorder %s18, 1
      %p48 = por %p46, %p47
      %p49 = scmp.ne.s32.totalorder %s38, %s39
      %p50 = scmp.eq.s32.totalorder %s18, 0
      %p51 = por %p49, %p50
      %p52 = scmp.ne.s32.totalorder %s38, %s39
      %p53 = scmp.eq.s32.totalorder %s19, 1
      %p54 = por %p52, %p53
      %p56 = scmp.ne.s32.totalorder %s39, %s55
      %p57 = scmp.eq.s32.totalorder %s19, 0
      %p58 = por %p56, %p57
      %s59 = ssub.s32 %s20, %s32
      %s60 = ssub.s32 %s21, %s28
      %s61 = sor.u32 %s59, %s60
      %p62 = scmp.eq.s32.totalorder %s61, 0
      %s64 = sadd.s32 %s63, 1
      %s65 = scalar_select %p62, %s63, %s64
      %p68 = pneg %p62
      %p69 = scmp.eq.s32.totalorder %s13, 1
      %p70 = por %p68, %p69
      %p71 = scmp.ne.s32.totalorder %s63, %s66
      %p72 = scmp.eq.s32.totalorder %s13, 0
      %p73 = por %p71, %p72
      %p74 = scmp.ne.s32.totalorder %s63, %s66
      %p75 = scmp.eq.s32.totalorder %s18, 1
      %p76 = por %p74, %p75
      %p77 = scmp.ne.s32.totalorder %s66, %s67
      %p78 = scmp.eq.s32.totalorder %s18, 0
      %p79 = por %p77, %p78
      %p80 = scmp.ne.s32.totalorder %s66, %s67
      %p81 = scmp.eq.s32.totalorder %s19, 1
      %p82 = por %p80, %p81
      %p84 = scmp.ne.s32.totalorder %s67, %s83
      %p85 = scmp.eq.s32.totalorder %s19, 0
      %p86 = por %p84, %p85
      %s88 = sadd.s32 %s87, 1
      %p91 = scmp.eq.s32.totalorder %s13, 1
      %p92 = scmp.ne.s32.totalorder %s87, %s89
      %p93 = scmp.eq.s32.totalorder %s13, 0
      %p94 = por %p92, %p93
      %p95 = scmp.ne.s32.totalorder %s87, %s89
      %p96 = scmp.eq.s32.totalorder %s18, 1
      %p97 = por %p95, %p96
      %p98 = scmp.ne.s32.totalorder %s89, %s90
      %p99 = scmp.eq.s32.totalorder %s18, 0
      %p100 = por %p98, %p99
      %p101 = scmp.ne.s32.totalorder %s89, %s90
      %p102 = scmp.eq.s32.totalorder %s19, 1
      %p103 = por %p101, %p102
      %p105 = scmp.ne.s32.totalorder %s90, %s104
      %p106 = scmp.eq.s32.totalorder %s19, 0
      %p107 = por %p105, %p106
      %s109 = sadd.s32 %s108, 1
      %p112 = scmp.eq.s32.totalorder %s13, 1
      %p113 = scmp.ne.s32.totalorder %s108, %s110
      %p114 = scmp.eq.s32.totalorder %s13, 0
      %p115 = por %p113, %p114
      %p116 = scmp.ne.s32.totalorder %s108, %s110
      %p117 = scmp.eq.s32.totalorder %s18, 1
      %p118 = por %p116, %p117
      %p119 = scmp.ne.s32.totalorder %s110, %s111
      %p120 = scmp.eq.s32.totalorder %s18, 0
      %p121 = por %p119, %p120
      %p122 = scmp.ne.s32.totalorder %s110, %s111
      %p123 = scmp.eq.s32.totalorder %s19, 1
      %p124 = por %p122, %p123
      %p126 = scmp.ne.s32.totalorder %s111, %s125
      %p127 = scmp.eq.s32.totalorder %s19, 0
      %p128 = por %p126, %p127
      %s129 = ssub.s32 %s20, %s32
      %s130 = ssub.s32 %s21, %s28
      %s131 = sor.u32 %s129, %s130
      %p132 = scmp.eq.s32.totalorder %s131, 0
      %s134 = sadd.s32 %s133, 1
      %s135 = scalar_select %p132, %s133, %s134
      %p138 = pneg %p132
      %p139 = scmp.eq.s32.totalorder %s13, 1
      %p140 = por %p138, %p139
      %p141 = scmp.ne.s32.totalorder %s133, %s136
      %p142 = scmp.eq.s32.totalorder %s13, 0
      %p143 = por %p141, %p142
      %p144 = scmp.ne.s32.totalorder %s133, %s136
      %p145 = scmp.eq.s32.totalorder %s18, 1
      %p146 = por %p144, %p145
      %p147 = scmp.ne.s32.totalorder %s136, %s137
      %p148 = scmp.eq.s32.totalorder %s18, 0
      %p149 = por %p147, %p148
      %p150 = scmp.ne.s32.totalorder %s136, %s137
      %p151 = scmp.eq.s32.totalorder %s19, 1
      %p152 = por %p150, %p151
      %p154 = scmp.ne.s32.totalorder %s137, %s153
      %p155 = scmp.eq.s32.totalorder %s19, 0
      %p156 = por %p154, %p155
      %p157 = scmp.le.s32.totalorder 1, %s13
      %p158 = scmp.lt.s32.totalorder %s13, 3
      %p159 = pnand %p157, %p158
      %p160 = pneg %p159
      // Predicated region
      $region9: #{tpu_custom_call.1} parent=5 // pred_check
        _
      $region10: #{tpu_custom_call.1} parent=5 // pred_check_branch
        %162 = sbr.rel (%p159) target = $region12
      $region11: #{tpu_custom_call.1} parent=5 // pred_region
        %s163 = ssub.s32 %s13, 1
        // Predicated region
        $region13: #{tpu_custom_call.1} parent=11 // pred_check
          %p164 = pneg %p100
        $region14: #{tpu_custom_call.1} parent=11 // pred_check_branch
          %166 = sbr.rel (%p164) target = $region16
        $region15: #{tpu_custom_call.1} parent=11 // pred_region
          _
        $region16: #{tpu_custom_call.1} parent=11 // pred_fallthru
          _
        // Predicated region
        $region17: #{tpu_custom_call.1} parent=11 // pred_check
          %p167 = pneg %p121
        $region18: #{tpu_custom_call.1} parent=11 // pred_check_branch
          %169 = sbr.rel (%p167) target = $region20
        $region19: #{tpu_custom_call.1} parent=11 // pred_region
          _
        $region20: #{tpu_custom_call.1} parent=11 // pred_fallthru
          _
      $region12: #{tpu_custom_call.1} parent=5 // pred_fallthru
        _
      %p170 = scmp.lt.s32.totalorder %s13, 2
      // Predicated region
      $region21: #{tpu_custom_call.1} parent=5 // pred_check
        %p171 = pneg %p170
      $region22: #{tpu_custom_call.1} parent=5 // pred_check_branch
        %173 = sbr.rel (%p171) target = $region24
      $region23: #{tpu_custom_call.1} parent=5 // pred_region
        // Predicated region
        $region25: #{tpu_custom_call.1} parent=23 // pred_check
          %p174 = pneg %p45
        $region26: #{tpu_custom_call.1} parent=23 // pred_check_branch
          %176 = sbr.rel (%p174) target = $region28
        $region27: #{tpu_custom_call.1} parent=23 // pred_region
          %p177 = scmp.lt.s32.totalorder %s20, 1
          %s178 = scalar_select %p177, %s20, 1
          %s179 = smul.addr %s178, 2
          %s180 = scalar_lea.vmem %s0, %s179
        $region28: #{tpu_custom_call.1} parent=23 // pred_fallthru
          _
        // Predicated region
        $region29: #{tpu_custom_call.1} parent=23 // pred_check
          %p181 = pneg %p73
        $region30: #{tpu_custom_call.1} parent=23 // pred_check_branch
          %183 = sbr.rel (%p181) target = $region32
        $region31: #{tpu_custom_call.1} parent=23 // pred_region
          %p184 = scmp.lt.s32.totalorder %s20, 1
          %s185 = scalar_select %p184, %s20, 1
          %p186 = scmp.lt.s32.totalorder %s21, 0
          %s187 = scalar_select %p186, %s21, 0
          %s188 = sadd.s32 %s187, %s185
          %s189 = smul.addr %s188, 4
          %s190 = scalar_lea.vmem %s1, %s189
        $region32: #{tpu_custom_call.1} parent=23 // pred_fallthru
          _
      $region24: #{tpu_custom_call.1} parent=5 // pred_fallthru
        _
      %p191 = scmp.le.s32.totalorder 1, %s13
      %p192 = scmp.lt.s32.totalorder %s13, 3
      %p193 = pnand %p191, %p192
      %p194 = pneg %p193
      // Predicated region
      $region33: #{tpu_custom_call.1} parent=5 // pred_check
        _
      $region34: #{tpu_custom_call.1} parent=5 // pred_check_branch
        %196 = sbr.rel (%p193) target = $region36
      $region35: #{tpu_custom_call.1} parent=5 // pred_region
        %s197 = ssub.s32 %s13, 1
        %p198 = scmp.lt.s32.totalorder %s22, 1
        %s199 = scalar_select %p198, %s22, 1
        %s200 = smul.addr %s199, 2
        %s201 = scalar_lea.vmem %s0, %s200
        %p202 = pneg %p51
        %p203 = pneg %p48
        %p204 = scmp.lt.s32.totalorder %s22, 1
        %s205 = scalar_select %p204, %s22, 1
        %p206 = scmp.lt.s32.totalorder %s23, 0
        %s207 = scalar_select %p206, %s23, 0
        %s208 = sadd.s32 %s207, %s205
        %s209 = smul.addr %s208, 4
        %s210 = scalar_lea.vmem %s1, %s209
        %p211 = pneg %p79
        %p212 = pneg %p76
        %p213 = pneg %p100
        %p214 = pneg %p97
        %p215 = pneg %p121
        %p216 = pneg %p118
        %p217 = pneg %p149
        %p218 = pneg %p146
        %s219 = sand.u32 %s136, 1
        %s220 = scalar_lea.sflag [#allocation3], %s219
        %s221 = sand.u32 %s136, 1
        %s222 = smul.addr %s221, 16
        %s223 = scalar_lea.vmem [#allocation2], %s222
        %p224 = scmp.lt.s32.totalorder %s22, 1
        %s225 = scalar_select %p224, %s22, 1
        %s226 = smul.addr %s225, 2
        %s227 = scalar_lea.vmem %s0, %s226
        %p228 = scmp.lt.s32.totalorder %s22, 1
        %s229 = scalar_select %p228, %s22, 1
        %p230 = scmp.lt.s32.totalorder %s23, 0
        %s231 = scalar_select %p230, %s23, 0
        %s232 = sadd.s32 %s231, %s229
        %s233 = smul.addr %s232, 4
        %s234 = scalar_lea.vmem %s1, %s233
        %v236 = vld [vmem:[%s227] sm:$0x3]
        %v237 = vld [vmem:[%s2] sm:$0xf]
        %s238 = scalar_lea.vmem %s2, 4
        %v239 = vld [vmem:[%s238] sm:$0xf]
        %v242 = vunpack.c.l.s4 1983009808
        %v243 = vunpack.c.0.s8 %v242
        %v244 = vlaneseq
        %v245 = vshrl.u32 %v244, 7
        %v246 = vsub.s32 %v243, %v245
        %v247 = vrot.slane %v236, %v246
        %248 = vrot.lane.b32.xlu0 %v247, 127
        %v249 = vpop.permute.xlu0 %248
        %vm250 = vcmask 31744
        %v252 = vsel %vm250, %v239, 0
        %vm254 = vcmask 1041408
        %v256 = vsel %vm254, %v249, 0
        %258 = vmatprep.subr.bf16.mxu0 0
        %259 = vmatpush1.bf16.msra.mxu0 0
        %260 = vmatprep.subr.bf16.mxu0 0
        %261 = vmatpush1.bf16.msra.mxu0 0
        %262 = vmatprep.subr.bf16.mxu0 0
        %263 = vmatpush1.bf16.msra.mxu0 0
        %264 = vmatprep.subr.bf16.mxu0 0
        %265 = vmatpush1.bf16.msra.mxu0 0
        %266 = vmatprep.subr.bf16.mxu0 0
        %267 = vmatpush1.bf16.msra.mxu0 0
        %268 = vmatprep.subr.bf16.mxu0 0
        %269 = vmatpush1.bf16.msra.mxu0 0
        %270 = vmatprep.subr.bf16.mxu0 0
        %271 = vmatpush1.bf16.msra.mxu0 0
        %272 = vmatprep.subr.bf16.mxu0 0
        %273 = vmatpush1.bf16.msra.mxu0 %v256
        %274 = vmatprep.subr.bf16.mxu0 0
        %275 = vmatpush2.bf16.msra.mxu0 0
        %276 = vmatprep.subr.bf16.mxu0 0
        %277 = vmatpush2.bf16.msra.mxu0 0
        %278 = vmatprep.subr.bf16.mxu0 0
        %279 = vmatpush2.bf16.msra.mxu0 0
        %280 = vmatprep.subr.bf16.mxu0 0
        %281 = vmatpush2.bf16.msra.mxu0 0
        %282 = vmatprep.subr.bf16.mxu0 0
        %283 = vmatpush2.bf16.msra.mxu0 0
        %284 = vmatprep.subr.bf16.mxu0 0
        %285 = vmatpush2.bf16.msra.mxu0 0
        %286 = vmatprep.subr.bf16.mxu0 0
        %287 = vmatpush2.bf16.msra.mxu0 0
        %288 = vmatprep.subr.bf16.mxu0 0
        %289 = vmatpush2.bf16.msra.mxu0 0
        %290 = vmatprep.mubr.bf16.mxu0 0
        %291 = vmatmul.mubr.bf16.gmra.mxu0 %v252
        %v292 = vpop.f32.mrf.mxu0
        %v293 = vadd.f32 0.0, %v292
        %v294 = vpop.f32.mrf.mxu0
        %v295 = vpop.f32.mrf.mxu0
        %v296 = vpop.f32.mrf.mxu0
        %297 = vdwg.mxu0
        %v299 = vsel %vm250, %v237, 0
        %v302 = vsel %vm254, %v236, 0
        %304 = vmatprep.subr.bf16.mxu0 0
        %305 = vmatpush1.bf16.msra.mxu0 0
        %306 = vmatprep.subr.bf16.mxu0 0
        %307 = vmatpush1.bf16.msra.mxu0 0
        %308 = vmatprep.subr.bf16.mxu0 0
        %309 = vmatpush1.bf16.msra.mxu0 0
        %310 = vmatprep.subr.bf16.mxu0 0
        %311 = vmatpush1.bf16.msra.mxu0 0
        %312 = vmatprep.subr.bf16.mxu0 0
        %313 = vmatpush1.bf16.msra.mxu0 0
        %314 = vmatprep.subr.bf16.mxu0 0
        %315 = vmatpush1.bf16.msra.mxu0 0
        %316 = vmatprep.subr.bf16.mxu0 0
        %317 = vmatpush1.bf16.msra.mxu0 0
        %318 = vmatprep.subr.bf16.mxu0 0
        %319 = vmatpush1.bf16.msra.mxu0 %v302
        %320 = vmatprep.subr.bf16.mxu0 0
        %321 = vmatpush2.bf16.msra.mxu0 0
        %322 = vmatprep.subr.bf16.mxu0 0
        %323 = vmatpush2.bf16.msra.mxu0 0
        %324 = vmatprep.subr.bf16.mxu0 0
        %325 = vmatpush2.bf16.msra.mxu0 0
        %326 = vmatprep.subr.bf16.mxu0 0
        %327 = vmatpush2.bf16.msra.mxu0 0
        %328 = vmatprep.subr.bf16.mxu0 0
        %329 = vmatpush2.bf16.msra.mxu0 0
        %330 = vmatprep.subr.bf16.mxu0 0
        %331 = vmatpush2.bf16.msra.mxu0 0
        %332 = vmatprep.subr.bf16.mxu0 0
        %333 = vmatpush2.bf16.msra.mxu0 0
        %334 = vmatprep.subr.bf16.mxu0 0
        %335 = vmatpush2.bf16.msra.mxu0 0
        %336 = vmatprep.mubr.bf16.mxu0 0
        %337 = vmatmul.mubr.bf16.gmra.mxu0 %v299
        %v338 = vpop.f32.mrf.mxu0
        %v339 = vadd.f32 %v293, %v338
        %v340 = vpop.f32.mrf.mxu0
        %v341 = vpop.f32.mrf.mxu0
        %v342 = vpop.f32.mrf.mxu0
        %343 = vdwg.mxu0
        %s344 = scalar_lea.vmem %s2, 8
        %v345 = vld [vmem:[%s344] sm:$0xf]
        %346 = vrot.lane.b32.xlu0 %v247, 126
        %v347 = vpop.permute.xlu0 %346
        %v349 = vsel %vm250, %v345, 0
        %v352 = vsel %vm254, %v347, 0
        %354 = vmatprep.subr.bf16.mxu0 0
        %355 = vmatpush1.bf16.msra.mxu0 0
        %356 = vmatprep.subr.bf16.mxu0 0
        %357 = vmatpush1.bf16.msra.mxu0 0
        %358 = vmatprep.subr.bf16.mxu0 0
        %359 = vmatpush1.bf16.msra.mxu0 0
        %360 = vmatprep.subr.bf16.mxu0 0
        %361 = vmatpush1.bf16.msra.mxu0 0
        %362 = vmatprep.subr.bf16.mxu0 0
        %363 = vmatpush1.bf16.msra.mxu0 0
        %364 = vmatprep.subr.bf16.mxu0 0
        %365 = vmatpush1.bf16.msra.mxu0 0
        %366 = vmatprep.subr.bf16.mxu0 0
        %367 = vmatpush1.bf16.msra.mxu0 0
        %368 = vmatprep.subr.bf16.mxu0 0
        %369 = vmatpush1.bf16.msra.mxu0 %v352
        %370 = vmatprep.subr.bf16.mxu0 0
        %371 = vmatpush2.bf16.msra.mxu0 0
        %372 = vmatprep.subr.bf16.mxu0 0
        %373 = vmatpush2.bf16.msra.mxu0 0
        %374 = vmatprep.subr.bf16.mxu0 0
        %375 = vmatpush2.bf16.msra.mxu0 0
        %376 = vmatprep.subr.bf16.mxu0 0
        %377 = vmatpush2.bf16.msra.mxu0 0
        %378 = vmatprep.subr.bf16.mxu0 0
        %379 = vmatpush2.bf16.msra.mxu0 0
        %380 = vmatprep.subr.bf16.mxu0 0
        %381 = vmatpush2.bf16.msra.mxu0 0
        %382 = vmatprep.subr.bf16.mxu0 0
        %383 = vmatpush2.bf16.msra.mxu0 0
        %384 = vmatprep.subr.bf16.mxu0 0
        %385 = vmatpush2.bf16.msra.mxu0 0
        %386 = vmatprep.mubr.bf16.mxu0 0
        %387 = vmatmul.mubr.bf16.gmra.mxu0 %v349
        %v388 = vpop.f32.mrf.mxu0
        %v389 = vadd.f32 0.0, %v388
        %v390 = vpop.f32.mrf.mxu0
        %v391 = vpop.f32.mrf.mxu0
        %v392 = vpop.f32.mrf.mxu0
        %393 = vdwg.mxu0
        %v394 = vadd.f32 %v339, %v389
        %s395 = scalar_lea.vmem %s2, 12
        %v396 = vld [vmem:[%s395] sm:$0xf]
        %397 = vrot.lane.b32.xlu0 %v247, 125
        %v398 = vpop.permute.xlu0 %397
        %v400 = vsel %vm250, %v396, 0
        %v403 = vsel %vm254, %v398, 0
        %405 = vmatprep.subr.bf16.mxu0 0
        %406 = vmatpush1.bf16.msra.mxu0 0
        %407 = vmatprep.subr.bf16.mxu0 0
        %408 = vmatpush1.bf16.msra.mxu0 0
        %409 = vmatprep.subr.bf16.mxu0 0
        %410 = vmatpush1.bf16.msra.mxu0 0
        %411 = vmatprep.subr.bf16.mxu0 0
        %412 = vmatpush1.bf16.msra.mxu0 0
        %413 = vmatprep.subr.bf16.mxu0 0
        %414 = vmatpush1.bf16.msra.mxu0 0
        %415 = vmatprep.subr.bf16.mxu0 0
        %416 = vmatpush1.bf16.msra.mxu0 0
        %417 = vmatprep.subr.bf16.mxu0 0
        %418 = vmatpush1.bf16.msra.mxu0 0
        %419 = vmatprep.subr.bf16.mxu0 0
        %420 = vmatpush1.bf16.msra.mxu0 %v403
        %421 = vmatprep.subr.bf16.mxu0 0
        %422 = vmatpush2.bf16.msra.mxu0 0
        %423 = vmatprep.subr.bf16.mxu0 0
        %424 = vmatpush2.bf16.msra.mxu0 0
        %425 = vmatprep.subr.bf16.mxu0 0
        %426 = vmatpush2.bf16.msra.mxu0 0
        %427 = vmatprep.subr.bf16.mxu0 0
        %428 = vmatpush2.bf16.msra.mxu0 0
        %429 = vmatprep.subr.bf16.mxu0 0
        %430 = vmatpush2.bf16.msra.mxu0 0
        %431 = vmatprep.subr.bf16.mxu0 0
        %432 = vmatpush2.bf16.msra.mxu0 0
        %433 = vmatprep.subr.bf16.mxu0 0
        %434 = vmatpush2.bf16.msra.mxu0 0
        %435 = vmatprep.subr.bf16.mxu0 0
        %436 = vmatpush2.bf16.msra.mxu0 0
        %437 = vmatprep.mubr.bf16.mxu0 0
        %438 = vmatmul.mubr.bf16.gmra.mxu0 %v400
        %v439 = vpop.f32.mrf.mxu0
        %v440 = vadd.f32 0.0, %v439
        %v441 = vpop.f32.mrf.mxu0
        %v442 = vpop.f32.mrf.mxu0
        %v443 = vpop.f32.mrf.mxu0
        %444 = vdwg.mxu0
        %v445 = vadd.f32 %v394, %v440
        %s446 = scalar_lea.vmem %s2, 16
        %v447 = vld [vmem:[%s446] sm:$0xf]
        %448 = vrot.lane.b32.xlu0 %v247, 124
        %v449 = vpop.permute.xlu0 %448
        %v451 = vsel %vm250, %v447, 0
        %v454 = vsel %vm254, %v449, 0
        %456 = vmatprep.subr.bf16.mxu0 0
        %457 = vmatpush1.bf16.msra.mxu0 0
        %458 = vmatprep.subr.bf16.mxu0 0
        %459 = vmatpush1.bf16.msra.mxu0 0
        %460 = vmatprep.subr.bf16.mxu0 0
        %461 = vmatpush1.bf16.msra.mxu0 0
        %462 = vmatprep.subr.bf16.mxu0 0
        %463 = vmatpush1.bf16.msra.mxu0 0
        %464 = vmatprep.subr.bf16.mxu0 0
        %465 = vmatpush1.bf16.msra.mxu0 0
        %466 = vmatprep.subr.bf16.mxu0 0
        %467 = vmatpush1.bf16.msra.mxu0 0
        %468 = vmatprep.subr.bf16.mxu0 0
        %469 = vmatpush1.bf16.msra.mxu0 0
        %470 = vmatprep.subr.bf16.mxu0 0
        %471 = vmatpush1.bf16.msra.mxu0 %v454
        %472 = vmatprep.subr.bf16.mxu0 0
        %473 = vmatpush2.bf16.msra.mxu0 0
        %474 = vmatprep.subr.bf16.mxu0 0
        %475 = vmatpush2.bf16.msra.mxu0 0
        %476 = vmatprep.subr.bf16.mxu0 0
        %477 = vmatpush2.bf16.msra.mxu0 0
        %478 = vmatprep.subr.bf16.mxu0 0
        %479 = vmatpush2.bf16.msra.mxu0 0
        %480 = vmatprep.subr.bf16.mxu0 0
        %481 = vmatpush2.bf16.msra.mxu0 0
        %482 = vmatprep.subr.bf16.mxu0 0
        %483 = vmatpush2.bf16.msra.mxu0 0
        %484 = vmatprep.subr.bf16.mxu0 0
        %485 = vmatpush2.bf16.msra.mxu0 0
        %486 = vmatprep.subr.bf16.mxu0 0
        %487 = vmatpush2.bf16.msra.mxu0 0
        %488 = vmatprep.mubr.bf16.mxu0 0
        %489 = vmatmul.mubr.bf16.gmra.mxu0 %v451
        %v490 = vpop.f32.mrf.mxu0
        %v491 = vadd.f32 0.0, %v490
        %v492 = vpop.f32.mrf.mxu0
        %v493 = vpop.f32.mrf.mxu0
        %v494 = vpop.f32.mrf.mxu0
        %495 = vdwg.mxu0
        %v496 = vadd.f32 %v445, %v491
        %v497 = vld [vmem:[%s3] sm:$0xff]
        %499 = vset.pattern.permute.xlu0 0
        %500 = vperm.xlu0 %499, %v497
        %v501 = vpop.permute.xlu0 %500
        %v503 = vadd.f32 %v496, %v501
        %v504 = vmax.f32 %v503, 0.0
        %vm505 = vcmask 130048
        %506 = vst.msk [vmem:[%s223] sm:$0xff] %vm505, %v504
        %v507 = vld [vmem:[%s234] sm:$0xf]
        %v508 = vunpack.c.l.bf16 %v507
        %v509 = vmax.f32 %v508, 0.0
        %510 = vst.msk [vmem:[%s223 + $0x8] sm:$0xff] %vm505, %v509
        %s511 = sand.u32 %s136, 1
        %s512 = scalar_lea.sflag [#allocation3], %s511
        %s513 = sand.u32 %s136, 1
        %s514 = smul.addr %s513, 16
        %s515 = scalar_lea.vmem [#allocation2], %s514
        // Predicated region
        $region37: #{tpu_custom_call.1} parent=35 // pred_check
          %p516 = pneg %p146
        $region38: #{tpu_custom_call.1} parent=35 // pred_check_branch
          %518 = sbr.rel (%p516) target = $region40
        $region39: #{tpu_custom_call.1} parent=35 // pred_region
          %s520 = ssub.s32 256, 256
          %521 = vsyncadd %s512, %s520
          %s522 = smul.addr %s22, 2
          %s523 = sadd.s32 %s23, %s522
          %s524 = smul.addr %s523, 128
          %s525 = scalar_lea.hbm %s4, %s524
          %s526 = sshll.u32 %s515, 4
          %s527 = int_to_ptr.vmem [resolvable:$true] %s526
          %532 = dma.vmem_to_hbm [thread:$0]  %s527, 256, %s525, %s512, 128, 128, 8
        $region40: #{tpu_custom_call.1} parent=35 // pred_fallthru
          _
      $region36: #{tpu_custom_call.1} parent=5 // pred_fallthru
        _
      %p533 = scmp.le.s32.totalorder 2, %s13
      // Predicated region
      $region41: #{tpu_custom_call.1} parent=5 // pred_check
        %p534 = pneg %p533
      $region42: #{tpu_custom_call.1} parent=5 // pred_check_branch
        %536 = sbr.rel (%p534) target = $region44
      $region43: #{tpu_custom_call.1} parent=5 // pred_region
        %s537 = ssub.s32 %s13, 2
        // Predicated region
        $region45: #{tpu_custom_call.1} parent=43 // pred_check
          %p538 = pneg %p152
        $region46: #{tpu_custom_call.1} parent=43 // pred_check_branch
          %540 = sbr.rel (%p538) target = $region48
        $region47: #{tpu_custom_call.1} parent=43 // pred_region
          %s541 = sand.u32 %s137, 1
          %s542 = scalar_lea.sflag [#allocation3], %s541
          %s543 = sand.u32 %s137, 1
          %s544 = smul.addr %s543, 16
          %s545 = scalar_lea.vmem [#allocation2], %s544
          %546 = dma.done %s542, 256
        $region48: #{tpu_custom_call.1} parent=43 // pred_fallthru
          _
      $region44: #{tpu_custom_call.1} parent=5 // pred_fallthru
        _
    $region6: #{tpu_custom_call.1} parent=1 // loop_footer
      %s17 = sadd.s32 1, %s13
    $region7: #{tpu_custom_call.1} parent=1 // loop_footer_branch
      %12 = sbr.rel target = $region3
    $region8: #{tpu_custom_call.1} parent=1 // loop_exit
      _
    %547 = vsyncpa [#allocation3], 1
    %s548 = scalar_lea.sflag [#allocation3], 1
    %549 = vsyncpa %s548, 1

</llo_original>
